<compile_context>
chip_gen: v7x
topology: tpu7x:2x2x1
jax: 0.10.0
libtpu: 0.0.40
codegen_flags: <defaults>
</compile_context>

<pallas_src>
import jax
import jax.numpy as jnp
from jax.experimental import pallas as pl
from jax.experimental.pallas import tpu as pltpu


def _residual_block_kernel(xa_ref, xb_ref, w0_ref, w1_ref, wr_ref, br_ref,
                           ws_ref, bs_ref, out_ref, skip_ref):
    # xa/xb blocks: (1, C, TL) f32 ; w* : bf16 (out, in) ; b* : (C,1)/(SC,1) f32
    xa = xa_ref[0]                         # (C, TL) f32, tap k=0
    xb = xb_ref[0]                         # (C, TL) f32, tap k=1 == residual input

    # Dilated conv (kernel_size=2): two channel-contraction matmuls on the MXU.
    dil = (jnp.dot(w0_ref[...], xa.astype(jnp.bfloat16),
                   preferred_element_type=jnp.float32)
           + jnp.dot(w1_ref[...], xb.astype(jnp.bfloat16),
                     preferred_element_type=jnp.float32))          # (C, TL) f32

    # Gated activation (f32, EUP transcendentals).
    gated = jnp.tanh(dil) * jax.nn.sigmoid(dil)
    gated_bf = gated.astype(jnp.bfloat16)

    # Residual 1x1 conv + residual add (add kept in f32).
    res = jnp.dot(wr_ref[...], gated_bf,
                  preferred_element_type=jnp.float32) + br_ref[...]
    out_ref[0] = (res + xb).astype(out_ref.dtype)

    # Skip 1x1 conv.
    skip = jnp.dot(ws_ref[...], gated_bf,
                   preferred_element_type=jnp.float32) + bs_ref[...]
    skip_ref[0] = skip.astype(skip_ref.dtype)


def residual_block(x, w_dil, w_res, b_res, w_skip, b_skip, *, dilation, skip_size):
    """x: (N, C, L)   w_dil: (C, C, 2)   w_res: (C, C, 1)   b_res: (C,)
       w_skip: (SC, C, 1)   b_skip: (SC,)
       Returns (output (N, C, L-d), skip_out (N, SC, skip_size)) in PyTorch NCL layout."""
    N, C, L = x.shape
    SC = w_skip.shape[0]
    d = int(dilation)
    L_out = L - d
    assert L_out > 0 and 0 < skip_size <= L_out

    # Two element-shifted views of x (layout stays NCL; no transposes anywhere).
    xa = x[:, :, :L_out]          # tap k=0
    xb = x[:, :, d:]              # tap k=1, also the residual-add input

    # Conv weights as (out, in) matrices, bf16 for the MXU; biases stay f32.
    w0 = w_dil[:, :, 0].astype(jnp.bfloat16)
    w1 = w_dil[:, :, 1].astype(jnp.bfloat16)
    wr = w_res[:, :, 0].astype(jnp.bfloat16)
    ws = w_skip[:, :, 0].astype(jnp.bfloat16)
    br = b_res.reshape(C, 1).astype(jnp.float32)
    bs = b_skip.reshape(SC, 1).astype(jnp.float32)

    # Time-axis tile: lane-dense (multiple of 128) or the full extent.
    TL = 512 if L_out > 512 else L_out
    grid = (N, pl.cdiv(L_out, TL))

    x_spec = pl.BlockSpec((1, C, TL), lambda n, j: (n, 0, j))

    def full_spec(shape):
        # whole-array block, constant index map -> DMA'd once, VMEM-resident
        return pl.BlockSpec(shape, lambda n, j: (0,) * len(shape))

    out, skip_full = pl.pallas_call(
        _residual_block_kernel,
        out_shape=(jax.ShapeDtypeStruct((N, C, L_out), x.dtype),
                   jax.ShapeDtypeStruct((N, SC, L_out), x.dtype)),
        grid_spec=pltpu.PrefetchScalarGridSpec(
            num_scalar_prefetch=0,
            grid=grid,
            in_specs=[x_spec, x_spec,
                      full_spec((C, C)), full_spec((C, C)),
                      full_spec((C, C)), full_spec((C, 1)),
                      full_spec((SC, C)), full_spec((SC, 1))],
            out_specs=[pl.BlockSpec((1, C, TL), lambda n, j: (n, 0, j)),
                       pl.BlockSpec((1, SC, TL), lambda n, j: (n, 0, j))],
        ),
        compiler_params=pltpu.CompilerParams(
            dimension_semantics=("parallel", "parallel"),
            vmem_limit_bytes=48 * 1024 * 1024,
        ),
    )(xa, xb, w0, w1, wr, br, ws, bs)

    # skip_size is a Python int here (runtime arg in PyTorch) -> static slice in wrapper.
    return out, skip_full[:, :, L_out - skip_size:]


def residual_block_ref(x, w_dil, w_res, b_res, w_skip, b_skip, *, dilation, skip_size):
    """Pure-JAX f32 reference matching the PyTorch forward pass."""
    d = dilation
    L_out = x.shape[-1] - d
    dil = (jnp.einsum("oc,ncl->nol", w_dil[:, :, 0], x[:, :, :L_out])
           + jnp.einsum("oc,ncl->nol", w_dil[:, :, 1], x[:, :, d:]))
    gated = jnp.tanh(dil) * jax.nn.sigmoid(dil)
    res = jnp.einsum("oc,ncl->nol", w_res[:, :, 0], gated) + b_res[None, :, None]
    out = res + x[:, :, d:]
    skip = jnp.einsum("oc,ncl->nol", w_skip[:, :, 0], gated) + b_skip[None, :, None]
    return out, skip[:, :, L_out - skip_size:]


if __name__ == "__main__":
    # Small deterministic config: batch=2, res channels=32, skip channels=64,
    # dilation=2, length=130 -> L_out = 128 (one lane-dense time tile), skip_size=64.
    N, C, SC = 2, 32, 64
    dilation, L, skip_size = 2, 130, 64

    key = jax.random.PRNGKey(0)
    kx, kd, kr, kbr, ks, kbs = jax.random.split(key, 6)
    x = jax.random.normal(kx, (N, C, L), dtype=jnp.float32)
    w_dil = jax.random.normal(kd, (C, C, 2), dtype=jnp.float32) * 0.1
    w_res = jax.random.normal(kr, (C, C, 1), dtype=jnp.float32) * 0.1
    b_res = jax.random.normal(kbr, (C,), dtype=jnp.float32) * 0.1
    w_skip = jax.random.normal(ks, (SC, C, 1), dtype=jnp.float32) * 0.1
    b_skip = jax.random.normal(kbs, (SC,), dtype=jnp.float32) * 0.1

    out, skip = residual_block(x, w_dil, w_res, b_res, w_skip, b_skip,
                               dilation=dilation, skip_size=skip_size)
    out = jax.block_until_ready(out)
    skip = jax.block_until_ready(skip)

    out_ref, skip_ref = residual_block_ref(x, w_dil, w_res, b_res, w_skip, b_skip,
                                           dilation=dilation, skip_size=skip_size)

    L_out = L - dilation
    assert out.shape == (N, C, L_out), out.shape
    assert skip.shape == (N, SC, skip_size), skip.shape
    # bf16 MXU operands with f32 accumulation -> loosened tolerance vs the f32 reference.
    assert jnp.allclose(out, out_ref, atol=2e-2, rtol=2e-2), "residual output mismatch"
    assert jnp.allclose(skip, skip_ref, atol=2e-2, rtol=2e-2), "skip output mismatch"

    print("KERNEL_OK")
</pallas_src>

<mosaic_0001>
module attributes {stable_mosaic.version = 11 : i64} {
  func.func @_residual_block_kernel(%arg0: i32, %arg1: i32, %arg2: memref<1x32x128xf32, #tpu.memory_space<vmem>>, %arg3: memref<1x32x128xf32, #tpu.memory_space<vmem>>, %arg4: memref<32x32xbf16, #tpu.memory_space<vmem>>, %arg5: memref<32x32xbf16, #tpu.memory_space<vmem>>, %arg6: memref<32x32xbf16, #tpu.memory_space<vmem>>, %arg7: memref<32x1xf32, #tpu.memory_space<vmem>>, %arg8: memref<64x32xbf16, #tpu.memory_space<vmem>>, %arg9: memref<64x1xf32, #tpu.memory_space<vmem>>, %arg10: memref<1x32x128xf32, #tpu.memory_space<vmem>>, %arg11: memref<1x64x128xf32, #tpu.memory_space<vmem>>) attributes {dimension_semantics = [#tpu.dimension_semantics<parallel>, #tpu.dimension_semantics<parallel>], iteration_bounds = array<i64: 2, 1>, scalar_prefetch = 0 : i64, scratch_operands = 0 : i64, tpu.core_type = #tpu.core_type<tc>, window_params = [{transform_indices = @transform_0, window_bounds = array<i64: 1, 32, 128>}, {transform_indices = @transform_1, window_bounds = array<i64: 1, 32, 128>}, {pipeline_mode = #tpu.pipeline_mode<synchronous>, transform_indices = @transform_2, window_bounds = array<i64: 32, 32>}, {pipeline_mode = #tpu.pipeline_mode<synchronous>, transform_indices = @transform_3, window_bounds = array<i64: 32, 32>}, {pipeline_mode = #tpu.pipeline_mode<synchronous>, transform_indices = @transform_4, window_bounds = array<i64: 32, 32>}, {pipeline_mode = #tpu.pipeline_mode<synchronous>, transform_indices = @transform_5, window_bounds = array<i64: 32, 1>}, {pipeline_mode = #tpu.pipeline_mode<synchronous>, transform_indices = @transform_6, window_bounds = array<i64: 64, 32>}, {pipeline_mode = #tpu.pipeline_mode<synchronous>, transform_indices = @transform_7, window_bounds = array<i64: 64, 1>}, {transform_indices = @transform_8, window_bounds = array<i64: 1, 32, 128>}, {transform_indices = @transform_9, window_bounds = array<i64: 1, 64, 128>}]} {
    %c0 = arith.constant 0 : index
    %c0_0 = arith.constant 0 : index
    %c0_1 = arith.constant 0 : index
    %0 = vector.load %arg2[%c0, %c0_0, %c0_1] : memref<1x32x128xf32, #tpu.memory_space<vmem>>, vector<1x32x128xf32>
    %1 = vector.shape_cast %0 : vector<1x32x128xf32> to vector<32x128xf32>
    %c0_2 = arith.constant 0 : index
    %c0_3 = arith.constant 0 : index
    %c0_4 = arith.constant 0 : index
    %2 = vector.load %arg3[%c0_2, %c0_3, %c0_4] : memref<1x32x128xf32, #tpu.memory_space<vmem>>, vector<1x32x128xf32>
    %3 = vector.shape_cast %2 : vector<1x32x128xf32> to vector<32x128xf32>
    %c0_5 = arith.constant 0 : index
    %c0_6 = arith.constant 0 : index
    %4 = vector.load %arg4[%c0_5, %c0_6] : memref<32x32xbf16, #tpu.memory_space<vmem>>, vector<32x32xbf16>
    %5 = arith.truncf %1 : vector<32x128xf32> to vector<32x128xbf16>
    %cst = arith.constant dense<0.000000e+00> : vector<32x128xf32>
    %6 = tpu.matmul %4, %5, %cst {dimension_numbers = #tpu.dot_dimension_numbers<[1], [0], [0], [1], [0, 0, 1, 1], [], []>} : vector<32x32xbf16>, vector<32x128xbf16>, vector<32x128xf32> -> vector<32x128xf32>
    %c0_7 = arith.constant 0 : index
    %c0_8 = arith.constant 0 : index
    %7 = vector.load %arg5[%c0_7, %c0_8] : memref<32x32xbf16, #tpu.memory_space<vmem>>, vector<32x32xbf16>
    %8 = arith.truncf %3 : vector<32x128xf32> to vector<32x128xbf16>
    %cst_9 = arith.constant dense<0.000000e+00> : vector<32x128xf32>
    %9 = tpu.matmul %7, %8, %cst_9 {dimension_numbers = #tpu.dot_dimension_numbers<[1], [0], [0], [1], [0, 0, 1, 1], [], []>} : vector<32x32xbf16>, vector<32x128xbf16>, vector<32x128xf32> -> vector<32x128xf32>
    %10 = arith.addf %6, %9 : vector<32x128xf32>
    %11 = math.tanh %10 : vector<32x128xf32>
    %12 = arith.negf %10 : vector<32x128xf32>
    %13 = math.exp %12 : vector<32x128xf32>
    %cst_10 = arith.constant 1.000000e+00 : f32
    %14 = vector.broadcast %cst_10 : f32 to vector<32x128xf32>
    %15 = arith.addf %14, %13 : vector<32x128xf32>
    %16 = arith.divf %14, %15 : vector<32x128xf32>
    %17 = arith.mulf %11, %16 : vector<32x128xf32>
    %18 = arith.truncf %17 : vector<32x128xf32> to vector<32x128xbf16>
    %c0_11 = arith.constant 0 : index
    %c0_12 = arith.constant 0 : index
    %19 = vector.load %arg6[%c0_11, %c0_12] : memref<32x32xbf16, #tpu.memory_space<vmem>>, vector<32x32xbf16>
    %cst_13 = arith.constant dense<0.000000e+00> : vector<32x128xf32>
    %20 = tpu.matmul %19, %18, %cst_13 {dimension_numbers = #tpu.dot_dimension_numbers<[1], [0], [0], [1], [0, 0, 1, 1], [], []>} : vector<32x32xbf16>, vector<32x128xbf16>, vector<32x128xf32> -> vector<32x128xf32>
    %c0_14 = arith.constant 0 : index
    %c0_15 = arith.constant 0 : index
    %21 = vector.load %arg7[%c0_14, %c0_15] : memref<32x1xf32, #tpu.memory_space<vmem>>, vector<32x1xf32>
    %22 = vector.broadcast %21 : vector<32x1xf32> to vector<32x128xf32>
    %23 = arith.addf %20, %22 : vector<32x128xf32>
    %24 = arith.addf %23, %3 : vector<32x128xf32>
    %c0_16 = arith.constant 0 : index
    %c0_17 = arith.constant 0 : index
    %c0_18 = arith.constant 0 : index
    %25 = vector.load %arg10[%c0_16, %c0_17, %c0_18] : memref<1x32x128xf32, #tpu.memory_space<vmem>>, vector<1x32x128xf32>
    %26 = vector.shape_cast %25 : vector<1x32x128xf32> to vector<32x128xf32>
    %27 = vector.shape_cast %24 : vector<32x128xf32> to vector<1x32x128xf32>
    tpu.vector_store %arg10[%c0_16, %c0_17, %c0_18], %27 {strides = array<i32>} : memref<1x32x128xf32, #tpu.memory_space<vmem>>, vector<1x32x128xf32>,
    %c0_19 = arith.constant 0 : index
    %c0_20 = arith.constant 0 : index
    %28 = vector.load %arg8[%c0_19, %c0_20] : memref<64x32xbf16, #tpu.memory_space<vmem>>, vector<64x32xbf16>
    %cst_21 = arith.constant dense<0.000000e+00> : vector<64x128xf32>
    %29 = tpu.matmul %28, %18, %cst_21 {dimension_numbers = #tpu.dot_dimension_numbers<[1], [0], [0], [1], [0, 0, 1, 1], [], []>} : vector<64x32xbf16>, vector<32x128xbf16>, vector<64x128xf32> -> vector<64x128xf32>
    %c0_22 = arith.constant 0 : index
    %c0_23 = arith.constant 0 : index
    %30 = vector.load %arg9[%c0_22, %c0_23] : memref<64x1xf32, #tpu.memory_space<vmem>>, vector<64x1xf32>
    %31 = vector.broadcast %30 : vector<64x1xf32> to vector<64x128xf32>
    %32 = arith.addf %29, %31 : vector<64x128xf32>
    %c0_24 = arith.constant 0 : index
    %c0_25 = arith.constant 0 : index
    %c0_26 = arith.constant 0 : index
    %33 = vector.load %arg11[%c0_24, %c0_25, %c0_26] : memref<1x64x128xf32, #tpu.memory_space<vmem>>, vector<1x64x128xf32>
    %34 = vector.shape_cast %33 : vector<1x64x128xf32> to vector<64x128xf32>
    %35 = vector.shape_cast %32 : vector<64x128xf32> to vector<1x64x128xf32>
    tpu.vector_store %arg11[%c0_24, %c0_25, %c0_26], %35 {strides = array<i32>} : memref<1x64x128xf32, #tpu.memory_space<vmem>>, vector<1x64x128xf32>,
    return
  }
  func.func @transform_0(%arg0: i32, %arg1: i32) -> (i32, i32, i32) {
    %c0_i32 = arith.constant 0 : i32
    %c0_i32_0 = arith.constant 0 : i32
    return %arg0, %c0_i32, %arg1 : i32, i32, i32
  }
  func.func @transform_1(%arg0: i32, %arg1: i32) -> (i32, i32, i32) {
    %c0_i32 = arith.constant 0 : i32
    %c0_i32_0 = arith.constant 0 : i32
    return %arg0, %c0_i32, %arg1 : i32, i32, i32
  }
  func.func @transform_2(%arg0: i32, %arg1: i32) -> (i32, i32) {
    %c0_i32 = arith.constant 0 : i32
    %c0_i32_0 = arith.constant 0 : i32
    %c0_i32_1 = arith.constant 0 : i32
    return %c0_i32, %c0_i32_0 : i32, i32
  }
  func.func @transform_3(%arg0: i32, %arg1: i32) -> (i32, i32) {
    %c0_i32 = arith.constant 0 : i32
    %c0_i32_0 = arith.constant 0 : i32
    %c0_i32_1 = arith.constant 0 : i32
    return %c0_i32, %c0_i32_0 : i32, i32
  }
  func.func @transform_4(%arg0: i32, %arg1: i32) -> (i32, i32) {
    %c0_i32 = arith.constant 0 : i32
    %c0_i32_0 = arith.constant 0 : i32
    %c0_i32_1 = arith.constant 0 : i32
    return %c0_i32, %c0_i32_0 : i32, i32
  }
  func.func @transform_5(%arg0: i32, %arg1: i32) -> (i32, i32) {
    %c0_i32 = arith.constant 0 : i32
    %c0_i32_0 = arith.constant 0 : i32
    %c0_i32_1 = arith.constant 0 : i32
    return %c0_i32, %c0_i32_0 : i32, i32
  }
  func.func @transform_6(%arg0: i32, %arg1: i32) -> (i32, i32) {
    %c0_i32 = arith.constant 0 : i32
    %c0_i32_0 = arith.constant 0 : i32
    %c0_i32_1 = arith.constant 0 : i32
    return %c0_i32, %c0_i32_0 : i32, i32
  }
  func.func @transform_7(%arg0: i32, %arg1: i32) -> (i32, i32) {
    %c0_i32 = arith.constant 0 : i32
    %c0_i32_0 = arith.constant 0 : i32
    %c0_i32_1 = arith.constant 0 : i32
    return %c0_i32, %c0_i32_0 : i32, i32
  }
  func.func @transform_8(%arg0: i32, %arg1: i32) -> (i32, i32, i32) {
    %c0_i32 = arith.constant 0 : i32
    %c0_i32_0 = arith.constant 0 : i32
    return %arg0, %c0_i32, %arg1 : i32, i32, i32
  }
  func.func @transform_9(%arg0: i32, %arg1: i32) -> (i32, i32, i32) {
    %c0_i32 = arith.constant 0 : i32
    %c0_i32_0 = arith.constant 0 : i32
    return %arg0, %c0_i32, %arg1 : i32, i32, i32
  }
}

</mosaic_0001>

<llo_original>
// kernel: tpu_custom_call.1
$region0: #{tpu_custom_call.1}
  #allocation0 [shape = 'u32[]', space=smem, size = 0x4, offset = 0x4, fixed_abs, tag = 'smem constant byte address 0x4 - core index']
  #allocation1 [shape = 'u32[144,128]{1,0:T(1,128)}', space=vmem, size = 0x12000, scoped, tag = 'internal scratch']
  %s0 = inlined_call_operand.vmem [shape: f32[2,32,128], index: 0, kind: input, shape index: {}]
  %s1 = inlined_call_operand.vmem [shape: f32[2,32,128], index: 1, kind: input, shape index: {}]
  %s2 = inlined_call_operand.hbm [shape: bf16[32,32], index: 2, kind: input, shape index: {}]
  %s3 = inlined_call_operand.hbm [shape: bf16[32,32], index: 3, kind: input, shape index: {}]
  %s4 = inlined_call_operand.vmem [shape: bf16[32,32], index: 4, kind: input, shape index: {}]
  %s5 = inlined_call_operand.vmem [shape: f32[32,1], index: 5, kind: input, shape index: {}]
  %s6 = inlined_call_operand.vmem [shape: bf16[64,32], index: 6, kind: input, shape index: {}]
  %s7 = inlined_call_operand.vmem [shape: f32[64,1], index: 7, kind: input, shape index: {}]
  %s8 = inlined_call_operand.hbm [shape: f32[2,32,128], index: 8, kind: output, shape index: {0}]
  %s9 = inlined_call_operand.hbm [shape: f32[2,64,128], index: 9, kind: output, shape index: {1}]
  %10 = xla_tuple %s8, %s9
  %s11 = sld [smem:[#allocation0]]
  $region81: #{tpu_custom_call.1} parent=0
    _
  %s13 = ssub.s32 1, %s11
  %s14 = scalar_select 0, %s13, %s11
  $region1: #{tpu_custom_call.1} parent=0
    #allocation2 [shape = 'u8[8192]{0}', space=vmem, size = 0x2000, scoped, tag = 'input window, operand 2, single buffered']
    #allocation3 [shape = 's32[2]{0}', space=sflag, size = 0x8, scoped, tag = 'scoped memory for tpu_custom_call.1']
    #allocation4 [shape = 's32[2]{0}', space=sflag, size = 0x8, scoped, tag = 'scoped memory for tpu_custom_call.1']
    #allocation5 [shape = 'u8[8192]{0}', space=vmem, size = 0x2000, scoped, tag = 'input window, operand 3, single buffered']
    #allocation6 [shape = 's32[1]{0}', space=sflag, size = 0x4, scoped, tag = 'scoped memory for tpu_custom_call.1']
    #allocation7 [shape = 'u8[32768]{0}', space=vmem, size = 0x8000, scoped, tag = 'output window, operand 0']
    #allocation8 [shape = 'u8[65536]{0}', space=vmem, size = 0x10000, scoped, tag = 'output window, operand 1']
    #allocation9 [shape = 's32[2]{0}', space=sflag, size = 0x8, scoped, tag = 'scoped memory for tpu_custom_call.1']
    %15 = vsyncpa [#allocation3], 0
    %16 = vsyncpa [#allocation6], 0
    %17 = vsyncpa [#allocation4], 0
    %s18 = scalar_lea.sflag [#allocation4], 1
    %19 = vsyncpa %s18, 0
    %20 = vsyncpa [#allocation9], 0
    %s21 = scalar_lea.sflag [#allocation9], 1
    %22 = vsyncpa %s21, 0
    loop: start=0, step=1, limit=4
    $region2: #{tpu_custom_call.1} parent=1 // loop_pre_header
      _
    $region3: #{tpu_custom_call.1} parent=1 // loop_header
      %s24 = sphi 0, %s28
      %p25 = scmp.ge.s32.totalorder %s24, 4
      %s31 = sphi 0, %s43
      %s32 = sphi 0, %s39
      %s33 = sphi 0, %s31
      %s34 = sphi 0, %s32
      %s35 = sphi 0, %s33
      %s36 = sphi 0, %s34
      %s48 = sphi 0, %s50
      %s51 = sphi 0, %s48
      %s52 = sphi 0, %s51
      %s68 = sphi 0, %s52
      %s76 = sphi 0, %s78
      %s79 = sphi 0, %s76
      %s80 = sphi 0, %s79
      %s96 = sphi 0, %s80
      %s100 = sphi 0, %s100
      %s102 = sphi 0, %s100
      %s103 = sphi 0, %s102
      %s117 = sphi 0, %s103
      %s121 = sphi 0, %s121
      %s123 = sphi 0, %s121
      %s124 = sphi 0, %s123
      %s138 = sphi 0, %s124
      %s142 = sphi 0, %s142
      %s144 = sphi 0, %s142
      %s145 = sphi 0, %s144
      %s159 = sphi 0, %s145
      %s163 = sphi 0, %s163
      %s165 = sphi 0, %s163
      %s166 = sphi 0, %s165
      %s180 = sphi 0, %s166
      %s184 = sphi 0, %s184
      %s186 = sphi 0, %s184
      %s187 = sphi 0, %s186
      %s201 = sphi 0, %s187
      %s205 = sphi 0, %s205
      %s207 = sphi 0, %s205
      %s208 = sphi 0, %s207
      %s222 = sphi 0, %s208
      %s230 = sphi 0, %s232
      %s233 = sphi 0, %s230
      %s234 = sphi 0, %s233
      %s250 = sphi 0, %s234
      %s258 = sphi 0, %s260
      %s261 = sphi 0, %s258
      %s262 = sphi 0, %s261
      %s278 = sphi 0, %s262
    $region4: #{tpu_custom_call.1} parent=1 // loop_header_branch
      %27 = sbr.rel (%p25) target = $region8
    $region5: #{tpu_custom_call.1} parent=1 // loop_body
      %s29 = ssub.s32 %s24, 1
      %s30 = ssub.s32 %s24, 2
      %s37 = sadd.s32 1, %s32
      %p38 = scmp.ge.s32.totalorder %s37, 1
      %s39 = scalar_select %p38, 0, %s37
      %s40 = sadd.s32 1, %s31
      %s41 = scalar_select %p38, %s40, %s31
      %p42 = scmp.ge.s32.totalorder %s41, 2
      %s43 = scalar_select %p42, 0, %s41
      %s44 = ssub.s32 %s31, %s43
      %s45 = ssub.s32 %s32, %s39
      %s46 = sor.u32 %s44, %s45
      %p47 = scmp.eq.s32.totalorder %s46, 0
      %s49 = sadd.s32 %s48, 1
      %s50 = scalar_select %p47, %s48, %s49
      %p53 = pneg %p47
      %p54 = scmp.eq.s32.totalorder %s24, 1
      %p55 = por %p53, %p54
      %p56 = scmp.ne.s32.totalorder %s48, %s51
      %p57 = scmp.eq.s32.totalorder %s24, 0
      %p58 = por %p56, %p57
      %p59 = scmp.ne.s32.totalorder %s48, %s51
      %p60 = scmp.eq.s32.totalorder %s29, 1
      %p61 = por %p59, %p60
      %p62 = scmp.ne.s32.totalorder %s51, %s52
      %p63 = scmp.eq.s32.totalorder %s29, 0
      %p64 = por %p62, %p63
      %p65 = scmp.ne.s32.totalorder %s51, %s52
      %p66 = scmp.eq.s32.totalorder %s30, 1
      %p67 = por %p65, %p66
      %p69 = scmp.ne.s32.totalorder %s52, %s68
      %p70 = scmp.eq.s32.totalorder %s30, 0
      %p71 = por %p69, %p70
      %s72 = ssub.s32 %s31, %s43
      %s73 = ssub.s32 %s32, %s39
      %s74 = sor.u32 %s72, %s73
      %p75 = scmp.eq.s32.totalorder %s74, 0
      %s77 = sadd.s32 %s76, 1
      %s78 = scalar_select %p75, %s76, %s77
      %p81 = pneg %p75
      %p82 = scmp.eq.s32.totalorder %s24, 1
      %p83 = por %p81, %p82
      %p84 = scmp.ne.s32.totalorder %s76, %s79
      %p85 = scmp.eq.s32.totalorder %s24, 0
      %p86 = por %p84, %p85
      %p87 = scmp.ne.s32.totalorder %s76, %s79
      %p88 = scmp.eq.s32.totalorder %s29, 1
      %p89 = por %p87, %p88
      %p90 = scmp.ne.s32.totalorder %s79, %s80
      %p91 = scmp.eq.s32.totalorder %s29, 0
      %p92 = por %p90, %p91
      %p93 = scmp.ne.s32.totalorder %s79, %s80
      %p94 = scmp.eq.s32.totalorder %s30, 1
      %p95 = por %p93, %p94
      %p97 = scmp.ne.s32.totalorder %s80, %s96
      %p98 = scmp.eq.s32.totalorder %s30, 0
      %p99 = por %p97, %p98
      %s101 = sadd.s32 %s100, 1
      %p104 = scmp.eq.s32.totalorder %s24, 1
      %p105 = scmp.ne.s32.totalorder %s100, %s102
      %p106 = scmp.eq.s32.totalorder %s24, 0
      %p107 = por %p105, %p106
      %p108 = scmp.ne.s32.totalorder %s100, %s102
      %p109 = scmp.eq.s32.totalorder %s29, 1
      %p110 = por %p108, %p109
      %p111 = scmp.ne.s32.totalorder %s102, %s103
      %p112 = scmp.eq.s32.totalorder %s29, 0
      %p113 = por %p111, %p112
      %p114 = scmp.ne.s32.totalorder %s102, %s103
      %p115 = scmp.eq.s32.totalorder %s30, 1
      %p116 = por %p114, %p115
      %p118 = scmp.ne.s32.totalorder %s103, %s117
      %p119 = scmp.eq.s32.totalorder %s30, 0
      %p120 = por %p118, %p119
      %s122 = sadd.s32 %s121, 1
      %p125 = scmp.eq.s32.totalorder %s24, 1
      %p126 = scmp.ne.s32.totalorder %s121, %s123
      %p127 = scmp.eq.s32.totalorder %s24, 0
      %p128 = por %p126, %p127
      %p129 = scmp.ne.s32.totalorder %s121, %s123
      %p130 = scmp.eq.s32.totalorder %s29, 1
      %p131 = por %p129, %p130
      %p132 = scmp.ne.s32.totalorder %s123, %s124
      %p133 = scmp.eq.s32.totalorder %s29, 0
      %p134 = por %p132, %p133
      %p135 = scmp.ne.s32.totalorder %s123, %s124
      %p136 = scmp.eq.s32.totalorder %s30, 1
      %p137 = por %p135, %p136
      %p139 = scmp.ne.s32.totalorder %s124, %s138
      %p140 = scmp.eq.s32.totalorder %s30, 0
      %p141 = por %p139, %p140
      %s143 = sadd.s32 %s142, 1
      %p146 = scmp.eq.s32.totalorder %s24, 1
      %p147 = scmp.ne.s32.totalorder %s142, %s144
      %p148 = scmp.eq.s32.totalorder %s24, 0
      %p149 = por %p147, %p148
      %p150 = scmp.ne.s32.totalorder %s142, %s144
      %p151 = scmp.eq.s32.totalorder %s29, 1
      %p152 = por %p150, %p151
      %p153 = scmp.ne.s32.totalorder %s144, %s145
      %p154 = scmp.eq.s32.totalorder %s29, 0
      %p155 = por %p153, %p154
      %p156 = scmp.ne.s32.totalorder %s144, %s145
      %p157 = scmp.eq.s32.totalorder %s30, 1
      %p158 = por %p156, %p157
      %p160 = scmp.ne.s32.totalorder %s145, %s159
      %p161 = scmp.eq.s32.totalorder %s30, 0
      %p162 = por %p160, %p161
      %s164 = sadd.s32 %s163, 1
      %p167 = scmp.eq.s32.totalorder %s24, 1
      %p168 = scmp.ne.s32.totalorder %s163, %s165
      %p169 = scmp.eq.s32.totalorder %s24, 0
      %p170 = por %p168, %p169
      %p171 = scmp.ne.s32.totalorder %s163, %s165
      %p172 = scmp.eq.s32.totalorder %s29, 1
      %p173 = por %p171, %p172
      %p174 = scmp.ne.s32.totalorder %s165, %s166
      %p175 = scmp.eq.s32.totalorder %s29, 0
      %p176 = por %p174, %p175
      %p177 = scmp.ne.s32.totalorder %s165, %s166
      %p178 = scmp.eq.s32.totalorder %s30, 1
      %p179 = por %p177, %p178
      %p181 = scmp.ne.s32.totalorder %s166, %s180
      %p182 = scmp.eq.s32.totalorder %s30, 0
      %p183 = por %p181, %p182
      %s185 = sadd.s32 %s184, 1
      %p188 = scmp.eq.s32.totalorder %s24, 1
      %p189 = scmp.ne.s32.totalorder %s184, %s186
      %p190 = scmp.eq.s32.totalorder %s24, 0
      %p191 = por %p189, %p190
      %p192 = scmp.ne.s32.totalorder %s184, %s186
      %p193 = scmp.eq.s32.totalorder %s29, 1
      %p194 = por %p192, %p193
      %p195 = scmp.ne.s32.totalorder %s186, %s187
      %p196 = scmp.eq.s32.totalorder %s29, 0
      %p197 = por %p195, %p196
      %p198 = scmp.ne.s32.totalorder %s186, %s187
      %p199 = scmp.eq.s32.totalorder %s30, 1
      %p200 = por %p198, %p199
      %p202 = scmp.ne.s32.totalorder %s187, %s201
      %p203 = scmp.eq.s32.totalorder %s30, 0
      %p204 = por %p202, %p203
      %s206 = sadd.s32 %s205, 1
      %p209 = scmp.eq.s32.totalorder %s24, 1
      %p210 = scmp.ne.s32.totalorder %s205, %s207
      %p211 = scmp.eq.s32.totalorder %s24, 0
      %p212 = por %p210, %p211
      %p213 = scmp.ne.s32.totalorder %s205, %s207
      %p214 = scmp.eq.s32.totalorder %s29, 1
      %p215 = por %p213, %p214
      %p216 = scmp.ne.s32.totalorder %s207, %s208
      %p217 = scmp.eq.s32.totalorder %s29, 0
      %p218 = por %p216, %p217
      %p219 = scmp.ne.s32.totalorder %s207, %s208
      %p220 = scmp.eq.s32.totalorder %s30, 1
      %p221 = por %p219, %p220
      %p223 = scmp.ne.s32.totalorder %s208, %s222
      %p224 = scmp.eq.s32.totalorder %s30, 0
      %p225 = por %p223, %p224
      %s226 = ssub.s32 %s31, %s43
      %s227 = ssub.s32 %s32, %s39
      %s228 = sor.u32 %s226, %s227
      %p229 = scmp.eq.s32.totalorder %s228, 0
      %s231 = sadd.s32 %s230, 1
      %s232 = scalar_select %p229, %s230, %s231
      %p235 = pneg %p229
      %p236 = scmp.eq.s32.totalorder %s24, 1
      %p237 = por %p235, %p236
      %p238 = scmp.ne.s32.totalorder %s230, %s233
      %p239 = scmp.eq.s32.totalorder %s24, 0
      %p240 = por %p238, %p239
      %p241 = scmp.ne.s32.totalorder %s230, %s233
      %p242 = scmp.eq.s32.totalorder %s29, 1
      %p243 = por %p241, %p242
      %p244 = scmp.ne.s32.totalorder %s233, %s234
      %p245 = scmp.eq.s32.totalorder %s29, 0
      %p246 = por %p244, %p245
      %p247 = scmp.ne.s32.totalorder %s233, %s234
      %p248 = scmp.eq.s32.totalorder %s30, 1
      %p249 = por %p247, %p248
      %p251 = scmp.ne.s32.totalorder %s234, %s250
      %p252 = scmp.eq.s32.totalorder %s30, 0
      %p253 = por %p251, %p252
      %s254 = ssub.s32 %s31, %s43
      %s255 = ssub.s32 %s32, %s39
      %s256 = sor.u32 %s254, %s255
      %p257 = scmp.eq.s32.totalorder %s256, 0
      %s259 = sadd.s32 %s258, 1
      %s260 = scalar_select %p257, %s258, %s259
      %p263 = pneg %p257
      %p264 = scmp.eq.s32.totalorder %s24, 1
      %p265 = por %p263, %p264
      %p266 = scmp.ne.s32.totalorder %s258, %s261
      %p267 = scmp.eq.s32.totalorder %s24, 0
      %p268 = por %p266, %p267
      %p269 = scmp.ne.s32.totalorder %s258, %s261
      %p270 = scmp.eq.s32.totalorder %s29, 1
      %p271 = por %p269, %p270
      %p272 = scmp.ne.s32.totalorder %s261, %s262
      %p273 = scmp.eq.s32.totalorder %s29, 0
      %p274 = por %p272, %p273
      %p275 = scmp.ne.s32.totalorder %s261, %s262
      %p276 = scmp.eq.s32.totalorder %s30, 1
      %p277 = por %p275, %p276
      %p279 = scmp.ne.s32.totalorder %s262, %s278
      %p280 = scmp.eq.s32.totalorder %s30, 0
      %p281 = por %p279, %p280
      %p282 = scmp.le.s32.totalorder 1, %s24
      %p283 = scmp.lt.s32.totalorder %s24, 3
      %p284 = pnand %p282, %p283
      %p285 = pneg %p284
      // Predicated region
      $region9: #{tpu_custom_call.1} parent=5 // pred_check
        _
      $region10: #{tpu_custom_call.1} parent=5 // pred_check_branch
        %287 = sbr.rel (%p284) target = $region12
      $region11: #{tpu_custom_call.1} parent=5 // pred_region
        %s288 = ssub.s32 %s24, 1
        // Predicated region
        $region13: #{tpu_custom_call.1} parent=11 // pred_check
          %p289 = pneg %p113
        $region14: #{tpu_custom_call.1} parent=11 // pred_check_branch
          %291 = sbr.rel (%p289) target = $region16
        $region15: #{tpu_custom_call.1} parent=11 // pred_region
          %s293 = ssub.s32 256, 256
          %294 = vsyncadd [#allocation3], %s293
          %s295 = sshll.u32 [#allocation2], 4
          %s296 = int_to_ptr.vmem [resolvable:$true] %s295
          %301 = dma.hbm_to_vmem [thread:$0]  %s2, 256, %s296, [#allocation3], 64, 64, 4
        $region16: #{tpu_custom_call.1} parent=11 // pred_fallthru
          _
        // Predicated region
        $region17: #{tpu_custom_call.1} parent=11 // pred_check
          %p302 = pneg %p134
        $region18: #{tpu_custom_call.1} parent=11 // pred_check_branch
          %304 = sbr.rel (%p302) target = $region20
        $region19: #{tpu_custom_call.1} parent=11 // pred_region
          %s306 = ssub.s32 256, 256
          %307 = vsyncadd [#allocation6], %s306
          %s308 = sshll.u32 [#allocation5], 4
          %s309 = int_to_ptr.vmem [resolvable:$true] %s308
          %314 = dma.hbm_to_vmem [thread:$0]  %s3, 256, %s309, [#allocation6], 64, 64, 4
        $region20: #{tpu_custom_call.1} parent=11 // pred_fallthru
          _
        // Predicated region
        $region21: #{tpu_custom_call.1} parent=11 // pred_check
          %p315 = pneg %p155
        $region22: #{tpu_custom_call.1} parent=11 // pred_check_branch
          %317 = sbr.rel (%p315) target = $region24
        $region23: #{tpu_custom_call.1} parent=11 // pred_region
          _
        $region24: #{tpu_custom_call.1} parent=11 // pred_fallthru
          _
        // Predicated region
        $region25: #{tpu_custom_call.1} parent=11 // pred_check
          %p318 = pneg %p176
        $region26: #{tpu_custom_call.1} parent=11 // pred_check_branch
          %320 = sbr.rel (%p318) target = $region28
        $region27: #{tpu_custom_call.1} parent=11 // pred_region
          _
        $region28: #{tpu_custom_call.1} parent=11 // pred_fallthru
          _
        // Predicated region
        $region29: #{tpu_custom_call.1} parent=11 // pred_check
          %p321 = pneg %p197
        $region30: #{tpu_custom_call.1} parent=11 // pred_check_branch
          %323 = sbr.rel (%p321) target = $region32
        $region31: #{tpu_custom_call.1} parent=11 // pred_region
          _
        $region32: #{tpu_custom_call.1} parent=11 // pred_fallthru
          _
        // Predicated region
        $region33: #{tpu_custom_call.1} parent=11 // pred_check
          %p324 = pneg %p218
        $region34: #{tpu_custom_call.1} parent=11 // pred_check_branch
          %326 = sbr.rel (%p324) target = $region36
        $region35: #{tpu_custom_call.1} parent=11 // pred_region
          _
        $region36: #{tpu_custom_call.1} parent=11 // pred_fallthru
          _
      $region12: #{tpu_custom_call.1} parent=5 // pred_fallthru
        _
      %p327 = scmp.lt.s32.totalorder %s24, 2
      // Predicated region
      $region37: #{tpu_custom_call.1} parent=5 // pred_check
        %p328 = pneg %p327
      $region38: #{tpu_custom_call.1} parent=5 // pred_check_branch
        %330 = sbr.rel (%p328) target = $region40
      $region39: #{tpu_custom_call.1} parent=5 // pred_region
        // Predicated region
        $region41: #{tpu_custom_call.1} parent=39 // pred_check
          %p331 = pneg %p58
        $region42: #{tpu_custom_call.1} parent=39 // pred_check_branch
          %333 = sbr.rel (%p331) target = $region44
        $region43: #{tpu_custom_call.1} parent=39 // pred_region
          %p334 = scmp.lt.s32.totalorder %s31, 1
          %s335 = scalar_select %p334, %s31, 1
          %p336 = scmp.lt.s32.totalorder %s32, 0
          %s337 = scalar_select %p336, %s32, 0
          %s338 = smul.addr %s335, 4
          %s339 = sadd.s32 %s337, %s338
          %s340 = smul.addr %s339, 8
          %s341 = scalar_lea.vmem %s0, %s340
        $region44: #{tpu_custom_call.1} parent=39 // pred_fallthru
          _
        // Predicated region
        $region45: #{tpu_custom_call.1} parent=39 // pred_check
          %p342 = pneg %p86
        $region46: #{tpu_custom_call.1} parent=39 // pred_check_branch
          %344 = sbr.rel (%p342) target = $region48
        $region47: #{tpu_custom_call.1} parent=39 // pred_region
          %p345 = scmp.lt.s32.totalorder %s31, 1
          %s346 = scalar_select %p345, %s31, 1
          %p347 = scmp.lt.s32.totalorder %s32, 0
          %s348 = scalar_select %p347, %s32, 0
          %s349 = smul.addr %s346, 4
          %s350 = sadd.s32 %s348, %s349
          %s351 = smul.addr %s350, 8
          %s352 = scalar_lea.vmem %s1, %s351
        $region48: #{tpu_custom_call.1} parent=39 // pred_fallthru
          _
      $region40: #{tpu_custom_call.1} parent=5 // pred_fallthru
        _
      %p353 = scmp.le.s32.totalorder 1, %s24
      %p354 = scmp.lt.s32.totalorder %s24, 3
      %p355 = pnand %p353, %p354
      %p356 = pneg %p355
      // Predicated region
      $region49: #{tpu_custom_call.1} parent=5 // pred_check
        _
      $region50: #{tpu_custom_call.1} parent=5 // pred_check_branch
        %358 = sbr.rel (%p355) target = $region52
      $region51: #{tpu_custom_call.1} parent=5 // pred_region
        %s359 = ssub.s32 %s24, 1
        // Predicated region
        $region53: #{tpu_custom_call.1} parent=51 // pred_check
          %p360 = pneg %p113
        $region54: #{tpu_custom_call.1} parent=51 // pred_check_branch
          %362 = sbr.rel (%p360) target = $region56
        $region55: #{tpu_custom_call.1} parent=51 // pred_region
          %363 = dma.done [#allocation3], 256
        $region56: #{tpu_custom_call.1} parent=51 // pred_fallthru
          _
        // Predicated region
        $region57: #{tpu_custom_call.1} parent=51 // pred_check
          %p364 = pneg %p134
        $region58: #{tpu_custom_call.1} parent=51 // pred_check_branch
          %366 = sbr.rel (%p364) target = $region60
        $region59: #{tpu_custom_call.1} parent=51 // pred_region
          %367 = dma.done [#allocation6], 256
        $region60: #{tpu_custom_call.1} parent=51 // pred_fallthru
          _
        %p368 = scmp.lt.s32.totalorder %s33, 1
        %s369 = scalar_select %p368, %s33, 1
        %p370 = scmp.lt.s32.totalorder %s34, 0
        %s371 = scalar_select %p370, %s34, 0
        %s372 = smul.addr %s369, 4
        %s373 = sadd.s32 %s371, %s372
        %s374 = smul.addr %s373, 8
        %s375 = scalar_lea.vmem %s0, %s374
        %p376 = pneg %p64
        %p377 = pneg %p61
        %p378 = scmp.lt.s32.totalorder %s33, 1
        %s379 = scalar_select %p378, %s33, 1
        %p380 = scmp.lt.s32.totalorder %s34, 0
        %s381 = scalar_select %p380, %s34, 0
        %s382 = smul.addr %s379, 4
        %s383 = sadd.s32 %s381, %s382
        %s384 = smul.addr %s383, 8
        %s385 = scalar_lea.vmem %s1, %s384
        %p386 = pneg %p92
        %p387 = pneg %p89
        %p388 = pneg %p113
        %p389 = pneg %p110
        %p390 = pneg %p134
        %p391 = pneg %p131
        %p392 = pneg %p155
        %p393 = pneg %p152
        %p394 = pneg %p176
        %p395 = pneg %p173
        %p396 = pneg %p197
        %p397 = pneg %p194
        %p398 = pneg %p218
        %p399 = pneg %p215
        %p400 = pneg %p246
        %p401 = pneg %p243
        %s402 = sand.u32 %s233, 1
        %s403 = scalar_lea.sflag [#allocation4], %s402
        %s404 = sand.u32 %s233, 1
        %s405 = smul.addr %s404, 32
        %s406 = scalar_lea.vmem [#allocation7], %s405
        %p407 = pneg %p274
        %p408 = pneg %p271
        %s409 = sand.u32 %s261, 1
        %s410 = scalar_lea.sflag [#allocation9], %s409
        %s411 = sand.u32 %s261, 1
        %s412 = smul.addr %s411, 64
        %s413 = scalar_lea.vmem [#allocation8], %s412
        %p414 = scmp.lt.s32.totalorder %s33, 1
        %s415 = scalar_select %p414, %s33, 1
        %p416 = scmp.lt.s32.totalorder %s34, 0
        %s417 = scalar_select %p416, %s34, 0
        %s418 = smul.addr %s415, 4
        %s419 = sadd.s32 %s417, %s418
        %s420 = smul.addr %s419, 8
        %s421 = scalar_lea.vmem %s0, %s420
        %p422 = scmp.lt.s32.totalorder %s33, 1
        %s423 = scalar_select %p422, %s33, 1
        %p424 = scmp.lt.s32.totalorder %s34, 0
        %s425 = scalar_select %p424, %s34, 0
        %s426 = smul.addr %s423, 4
        %s427 = sadd.s32 %s425, %s426
        %s428 = smul.addr %s427, 8
        %s429 = scalar_lea.vmem %s1, %s428
        %v431 = vld [vmem:[%s421] sm:$0xff]
        %v432 = vld [vmem:[%s421 + $0x8] sm:$0xff]
        %v433 = vld [vmem:[%s421 + $0x10] sm:$0xff]
        %v434 = vld [vmem:[%s421 + $0x18] sm:$0xff]
        %v435 = vld [vmem:[%s429] sm:$0xff]
        %v436 = vld [vmem:[%s429 + $0x8] sm:$0xff]
        %v437 = vld [vmem:[%s429 + $0x10] sm:$0xff]
        %v438 = vld [vmem:[%s429 + $0x18] sm:$0xff]
        %v439 = vld [vmem:[#allocation2] sm:$0xf]
        %v440 = vld [vmem:[#allocation2 + $0x4] sm:$0xf]
        %v441 = vld [vmem:[#allocation2 + $0x8] sm:$0xf]
        %v442 = vld [vmem:[#allocation2 + $0xc] sm:$0xf]
        %v443 = vpack.c.bf16 %v432, %v431
        %v444 = vpack.c.bf16 %v434, %v433
        %v445 = vld [vmem:[#allocation5] sm:$0xf]
        %v446 = vld [vmem:[#allocation5 + $0x4] sm:$0xf]
        %v447 = vld [vmem:[#allocation5 + $0x8] sm:$0xf]
        %v448 = vld [vmem:[#allocation5 + $0xc] sm:$0xf]
        %v449 = vpack.c.bf16 %v436, %v435
        %v450 = vpack.c.bf16 %v438, %v437
        %v455 = vunpack.c.l.b16 %v445
        %v456 = vunpack.c.l.b16 %v446
        %v457 = vunpack.c.l.b16 %v447
        %v458 = vunpack.c.l.b16 %v448
        %v459 = vpack.c.b16 %v456, %v455
        %v460 = vpack.c.b16 %v458, %v457
        %vm461 = vcmask 261120
        %v463 = vsel %vm461, %v459, 0
        %v466 = vsel %vm461, %v460, 0
        %468 = vmatprep.subr.bf16.mxu0 0
        %469 = vmatpush1.bf16.msra.mxu0 %v449
        %470 = vmatprep.subr.bf16.mxu0 0
        %471 = vmatpush1.bf16.msra.mxu0 %v450
        %472 = vmatprep.subr.bf16.mxu0 0
        %473 = vmatpush1.bf16.msra.mxu0 0
        %474 = vmatprep.subr.bf16.mxu0 0
        %475 = vmatpush1.bf16.msra.mxu0 0
        %476 = vmatprep.subr.bf16.mxu0 0
        %477 = vmatpush1.bf16.msra.mxu0 0
        %478 = vmatprep.subr.bf16.mxu0 0
        %479 = vmatpush1.bf16.msra.mxu0 0
        %480 = vmatprep.subr.bf16.mxu0 0
        %481 = vmatpush1.bf16.msra.mxu0 0
        %482 = vmatprep.subr.bf16.mxu0 0
        %483 = vmatpush1.bf16.msra.mxu0 0
        %484 = vmatprep.subr.bf16.mxu0 0
        %485 = vmatpush1.bf16.msra.mxu0 0
        %486 = vmatprep.subr.bf16.mxu0 0
        %487 = vmatpush1.bf16.msra.mxu0 0
        %488 = vmatprep.subr.bf16.mxu0 0
        %489 = vmatpush1.bf16.msra.mxu0 0
        %490 = vmatprep.subr.bf16.mxu0 0
        %491 = vmatpush1.bf16.msra.mxu0 0
        %492 = vmatprep.subr.bf16.mxu0 0
        %493 = vmatpush1.bf16.msra.mxu0 0
        %494 = vmatprep.subr.bf16.mxu0 0
        %495 = vmatpush1.bf16.msra.mxu0 0
        %496 = vmatprep.subr.bf16.mxu0 0
        %497 = vmatpush1.bf16.msra.mxu0 0
        %498 = vmatprep.subr.bf16.mxu0 0
        %499 = vmatpush1.bf16.msra.mxu0 0
        %500 = vmatprep.mubr.bf16.mxu0 0
        %501 = vmatmul.mubr.bf16.gmra.mrb[0].mxu0 %v463
        %v502 = vpop.f32.mrb[0].mxu0
        %v503 = vadd.f32 0.0, %v502
        %v504 = vpop.f32.mrb[0].mxu0
        %v505 = vpop.f32.mrb[0].mxu0
        %v506 = vadd.f32 0.0, %v505
        %v507 = vpop.f32.mrb[0].mxu0
        %508 = vmatprep.mubr.bf16.mxu0 0
        %509 = vmatmul.mubr.bf16.gmra.mrb[0].mxu0 %v466
        %v510 = vpop.f32.mrb[0].mxu0
        %v511 = vadd.f32 0.0, %v510
        %v512 = vpop.f32.mrb[0].mxu0
        %v513 = vpop.f32.mrb[0].mxu0
        %v514 = vadd.f32 0.0, %v513
        %v515 = vpop.f32.mrb[0].mxu0
        %516 = vdwg.mxu0
        %v521 = vunpack.c.l.b16 %v439
        %v522 = vunpack.c.l.b16 %v440
        %v523 = vunpack.c.l.b16 %v441
        %v524 = vunpack.c.l.b16 %v442
        %v525 = vpack.c.b16 %v522, %v521
        %v526 = vpack.c.b16 %v524, %v523
        %v528 = vsel %vm461, %v525, 0
        %v531 = vsel %vm461, %v526, 0
        %533 = vmatprep.subr.bf16.mxu0 0
        %534 = vmatpush1.bf16.msra.mxu0 %v443
        %535 = vmatprep.subr.bf16.mxu0 0
        %536 = vmatpush1.bf16.msra.mxu0 %v444
        %537 = vmatprep.subr.bf16.mxu0 0
        %538 = vmatpush1.bf16.msra.mxu0 0
        %539 = vmatprep.subr.bf16.mxu0 0
        %540 = vmatpush1.bf16.msra.mxu0 0
        %541 = vmatprep.subr.bf16.mxu0 0
        %542 = vmatpush1.bf16.msra.mxu0 0
        %543 = vmatprep.subr.bf16.mxu0 0
        %544 = vmatpush1.bf16.msra.mxu0 0
        %545 = vmatprep.subr.bf16.mxu0 0
        %546 = vmatpush1.bf16.msra.mxu0 0
        %547 = vmatprep.subr.bf16.mxu0 0
        %548 = vmatpush1.bf16.msra.mxu0 0
        %549 = vmatprep.subr.bf16.mxu0 0
        %550 = vmatpush1.bf16.msra.mxu0 0
        %551 = vmatprep.subr.bf16.mxu0 0
        %552 = vmatpush1.bf16.msra.mxu0 0
        %553 = vmatprep.subr.bf16.mxu0 0
        %554 = vmatpush1.bf16.msra.mxu0 0
        %555 = vmatprep.subr.bf16.mxu0 0
        %556 = vmatpush1.bf16.msra.mxu0 0
        %557 = vmatprep.subr.bf16.mxu0 0
        %558 = vmatpush1.bf16.msra.mxu0 0
        %559 = vmatprep.subr.bf16.mxu0 0
        %560 = vmatpush1.bf16.msra.mxu0 0
        %561 = vmatprep.subr.bf16.mxu0 0
        %562 = vmatpush1.bf16.msra.mxu0 0
        %563 = vmatprep.subr.bf16.mxu0 0
        %564 = vmatpush1.bf16.msra.mxu0 0
        %565 = vmatprep.mubr.bf16.mxu0 0
        %566 = vmatmul.mubr.bf16.gmra.mrb[0].mxu0 %v528
        %v567 = vpop.f32.mrb[0].mxu0
        %v568 = vadd.f32 %v503, %v567
        %v569 = vpop.f32.mrb[0].mxu0
        %v570 = vpop.f32.mrb[0].mxu0
        %v571 = vadd.f32 %v506, %v570
        %v572 = vpop.f32.mrb[0].mxu0
        %573 = vmatprep.mubr.bf16.mxu0 0
        %574 = vmatmul.mubr.bf16.gmra.mrb[0].mxu0 %v531
        %v575 = vpop.f32.mrb[0].mxu0
        %v576 = vadd.f32 %v511, %v575
        %v577 = vpop.f32.mrb[0].mxu0
        %v578 = vpop.f32.mrb[0].mxu0
        %v579 = vadd.f32 %v514, %v578
        %v580 = vpop.f32.mrb[0].mxu0
        %581 = vdwg.mxu0
        %v582 = vtanh.pop %v568
        %v583 = vtanh.pop %v571
        %v584 = vtanh.pop %v576
        %v585 = vtanh.pop %v579
        %v586 = vxor.u32 %v568, 2147483648
        %v587 = vxor.u32 %v571, 2147483648
        %v588 = vxor.u32 %v576, 2147483648
        %v589 = vxor.u32 %v579, 2147483648
        %v590 = vmul.f32 %v586, 1.442695
        %v591 = vpow.pop %v590
        %v592 = vmul.f32 %v587, 1.442695
        %v593 = vpow.pop %v592
        %v594 = vmul.f32 %v588, 1.442695
        %v595 = vpow.pop %v594
        %v596 = vmul.f32 %v589, 1.442695
        %v597 = vpow.pop %v596
        %v598 = vadd.f32 %v591, 1.0
        %v599 = vadd.f32 %v593, 1.0
        %v600 = vadd.f32 %v595, 1.0
        %v601 = vadd.f32 %v597, 1.0
        %v602 = vrcp.pop %v598
        %v603 = vmul.f32 1.0, %v602
        %v604 = vrcp.pop %v599
        %v605 = vmul.f32 1.0, %v604
        %v606 = vrcp.pop %v600
        %v607 = vmul.f32 1.0, %v606
        %v608 = vrcp.pop %v601
        %v609 = vmul.f32 1.0, %v608
        %v610 = vmul.f32 %v582, %v603
        %v611 = vmul.f32 %v583, %v605
        %v612 = vmul.f32 %v584, %v607
        %v613 = vmul.f32 %v585, %v609
        %v614 = vpack.c.bf16 %v611, %v610
        %v615 = vpack.c.bf16 %v613, %v612
        %v616 = vld [vmem:[%s4] sm:$0xf]
        %v617 = vld [vmem:[%s4 + $0x4] sm:$0xf]
        %v618 = vld [vmem:[%s4 + $0x8] sm:$0xf]
        %v619 = vld [vmem:[%s4 + $0xc] sm:$0xf]
        %v620 = vld [vmem:[%s5] sm:$0xff]
        %v621 = vld [vmem:[%s5 + $0x8] sm:$0xff]
        %v622 = vld [vmem:[%s5 + $0x10] sm:$0xff]
        %v623 = vld [vmem:[%s5 + $0x18] sm:$0xff]
        %625 = vset.pattern.permute.xlu0 0
        %626 = vperm.xlu0 %625, %v620
        %v627 = vpop.permute.xlu0 %626
        %630 = vset.pattern.permute.xlu0 0
        %631 = vperm.xlu0 %630, %v621
        %v632 = vpop.permute.xlu0 %631
        %635 = vset.pattern.permute.xlu0 0
        %636 = vperm.xlu0 %635, %v622
        %v637 = vpop.permute.xlu0 %636
        %640 = vset.pattern.permute.xlu0 0
        %641 = vperm.xlu0 %640, %v623
        %v642 = vpop.permute.xlu0 %641
        %v648 = vunpack.c.l.b16 %v616
        %v649 = vunpack.c.l.b16 %v617
        %v650 = vunpack.c.l.b16 %v618
        %v651 = vunpack.c.l.b16 %v619
        %v652 = vpack.c.b16 %v649, %v648
        %v653 = vpack.c.b16 %v651, %v650
        %v655 = vsel %vm461, %v652, 0
        %v658 = vsel %vm461, %v653, 0
        %660 = vmatprep.subr.bf16.mxu0 0
        %661 = vmatpush1.bf16.msra.mxu0 %v614
        %662 = vmatprep.subr.bf16.mxu0 0
        %663 = vmatpush1.bf16.msra.mxu0 %v615
        %664 = vmatprep.subr.bf16.mxu0 0
        %665 = vmatpush1.bf16.msra.mxu0 0
        %666 = vmatprep.subr.bf16.mxu0 0
        %667 = vmatpush1.bf16.msra.mxu0 0
        %668 = vmatprep.subr.bf16.mxu0 0
        %669 = vmatpush1.bf16.msra.mxu0 0
        %670 = vmatprep.subr.bf16.mxu0 0
        %671 = vmatpush1.bf16.msra.mxu0 0
        %672 = vmatprep.subr.bf16.mxu0 0
        %673 = vmatpush1.bf16.msra.mxu0 0
        %674 = vmatprep.subr.bf16.mxu0 0
        %675 = vmatpush1.bf16.msra.mxu0 0
        %676 = vmatprep.subr.bf16.mxu0 0
        %677 = vmatpush1.bf16.msra.mxu0 0
        %678 = vmatprep.subr.bf16.mxu0 0
        %679 = vmatpush1.bf16.msra.mxu0 0
        %680 = vmatprep.subr.bf16.mxu0 0
        %681 = vmatpush1.bf16.msra.mxu0 0
        %682 = vmatprep.subr.bf16.mxu0 0
        %683 = vmatpush1.bf16.msra.mxu0 0
        %684 = vmatprep.subr.bf16.mxu0 0
        %685 = vmatpush1.bf16.msra.mxu0 0
        %686 = vmatprep.subr.bf16.mxu0 0
        %687 = vmatpush1.bf16.msra.mxu0 0
        %688 = vmatprep.subr.bf16.mxu0 0
        %689 = vmatpush1.bf16.msra.mxu0 0
        %690 = vmatprep.subr.bf16.mxu0 0
        %691 = vmatpush1.bf16.msra.mxu0 0
        %692 = vmatprep.mubr.bf16.mxu0 0
        %693 = vmatmul.mubr.bf16.gmra.mrb[0].mxu0 %v655
        %v694 = vpop.f32.mrb[0].mxu0
        %v695 = vadd.f32 %v627, %v694
        %v696 = vpop.f32.mrb[0].mxu0
        %v697 = vpop.f32.mrb[0].mxu0
        %v698 = vadd.f32 %v632, %v697
        %v699 = vpop.f32.mrb[0].mxu0
        %700 = vmatprep.mubr.bf16.mxu0 0
        %701 = vmatmul.mubr.bf16.gmra.mrb[0].mxu0 %v658
        %v702 = vpop.f32.mrb[0].mxu0
        %v703 = vadd.f32 %v637, %v702
        %v704 = vpop.f32.mrb[0].mxu0
        %v705 = vpop.f32.mrb[0].mxu0
        %v706 = vadd.f32 %v642, %v705
        %v707 = vpop.f32.mrb[0].mxu0
        %708 = vdwg.mxu0
        %v709 = vadd.f32 %v695, %v435
        %v710 = vadd.f32 %v698, %v436
        %v711 = vadd.f32 %v703, %v437
        %v712 = vadd.f32 %v706, %v438
        %713 = vst [vmem:[%s406] sm:$0xff] %v709
        %714 = vst [vmem:[%s406 + $0x8] sm:$0xff] %v710
        %715 = vst [vmem:[%s406 + $0x10] sm:$0xff] %v711
        %716 = vst [vmem:[%s406 + $0x18] sm:$0xff] %v712
        %v717 = vld [vmem:[%s6] sm:$0xf]
        %v718 = vld [vmem:[%s6 + $0x4] sm:$0xf]
        %v719 = vld [vmem:[%s6 + $0x8] sm:$0xf]
        %v720 = vld [vmem:[%s6 + $0xc] sm:$0xf]
        %v721 = vld [vmem:[%s6 + $0x10] sm:$0xf]
        %v722 = vld [vmem:[%s6 + $0x14] sm:$0xf]
        %v723 = vld [vmem:[%s6 + $0x18] sm:$0xf]
        %v724 = vld [vmem:[%s6 + $0x1c] sm:$0xf]
        %v725 = vld [vmem:[%s7] sm:$0xff]
        %v726 = vld [vmem:[%s7 + $0x8] sm:$0xff]
        %v727 = vld [vmem:[%s7 + $0x10] sm:$0xff]
        %v728 = vld [vmem:[%s7 + $0x18] sm:$0xff]
        %v729 = vld [vmem:[%s7 + $0x20] sm:$0xff]
        %v730 = vld [vmem:[%s7 + $0x28] sm:$0xff]
        %v731 = vld [vmem:[%s7 + $0x30] sm:$0xff]
        %v732 = vld [vmem:[%s7 + $0x38] sm:$0xff]
        %734 = vset.pattern.permute.xlu0 0
        %735 = vperm.xlu0 %734, %v725
        %v736 = vpop.permute.xlu0 %735
        %739 = vset.pattern.permute.xlu0 0
        %740 = vperm.xlu0 %739, %v726
        %v741 = vpop.permute.xlu0 %740
        %744 = vset.pattern.permute.xlu0 0
        %745 = vperm.xlu0 %744, %v727
        %v746 = vpop.permute.xlu0 %745
        %749 = vset.pattern.permute.xlu0 0
        %750 = vperm.xlu0 %749, %v728
        %v751 = vpop.permute.xlu0 %750
        %754 = vset.pattern.permute.xlu0 0
        %755 = vperm.xlu0 %754, %v729
        %v756 = vpop.permute.xlu0 %755
        %759 = vset.pattern.permute.xlu0 0
        %760 = vperm.xlu0 %759, %v730
        %v761 = vpop.permute.xlu0 %760
        %764 = vset.pattern.permute.xlu0 0
        %765 = vperm.xlu0 %764, %v731
        %v766 = vpop.permute.xlu0 %765
        %769 = vset.pattern.permute.xlu0 0
        %770 = vperm.xlu0 %769, %v732
        %v771 = vpop.permute.xlu0 %770
        %v781 = vunpack.c.l.b16 %v717
        %v782 = vunpack.c.l.b16 %v718
        %v783 = vunpack.c.l.b16 %v719
        %v784 = vunpack.c.l.b16 %v720
        %v785 = vunpack.c.l.b16 %v721
        %v786 = vunpack.c.l.b16 %v722
        %v787 = vunpack.c.l.b16 %v723
        %v788 = vunpack.c.l.b16 %v724
        %v789 = vpack.c.b16 %v782, %v781
        %v790 = vpack.c.b16 %v784, %v783
        %v791 = vpack.c.b16 %v786, %v785
        %v792 = vpack.c.b16 %v788, %v787
        %v794 = vsel %vm461, %v789, 0
        %v797 = vsel %vm461, %v790, 0
        %v800 = vsel %vm461, %v791, 0
        %v803 = vsel %vm461, %v792, 0
        %805 = vmatprep.subr.bf16.mxu0 0
        %806 = vmatpush1.bf16.msra.mxu0 %v614
        %807 = vmatprep.subr.bf16.mxu0 0
        %808 = vmatpush1.bf16.msra.mxu0 %v615
        %809 = vmatprep.subr.bf16.mxu0 0
        %810 = vmatpush1.bf16.msra.mxu0 0
        %811 = vmatprep.subr.bf16.mxu0 0
        %812 = vmatpush1.bf16.msra.mxu0 0
        %813 = vmatprep.subr.bf16.mxu0 0
        %814 = vmatpush1.bf16.msra.mxu0 0
        %815 = vmatprep.subr.bf16.mxu0 0
        %816 = vmatpush1.bf16.msra.mxu0 0
        %817 = vmatprep.subr.bf16.mxu0 0
        %818 = vmatpush1.bf16.msra.mxu0 0
        %819 = vmatprep.subr.bf16.mxu0 0
        %820 = vmatpush1.bf16.msra.mxu0 0
        %821 = vmatprep.subr.bf16.mxu0 0
        %822 = vmatpush1.bf16.msra.mxu0 0
        %823 = vmatprep.subr.bf16.mxu0 0
        %824 = vmatpush1.bf16.msra.mxu0 0
        %825 = vmatprep.subr.bf16.mxu0 0
        %826 = vmatpush1.bf16.msra.mxu0 0
        %827 = vmatprep.subr.bf16.mxu0 0
        %828 = vmatpush1.bf16.msra.mxu0 0
        %829 = vmatprep.subr.bf16.mxu0 0
        %830 = vmatpush1.bf16.msra.mxu0 0
        %831 = vmatprep.subr.bf16.mxu0 0
        %832 = vmatpush1.bf16.msra.mxu0 0
        %833 = vmatprep.subr.bf16.mxu0 0
        %834 = vmatpush1.bf16.msra.mxu0 0
        %835 = vmatprep.subr.bf16.mxu0 0
        %836 = vmatpush1.bf16.msra.mxu0 0
        %837 = vmatprep.mubr.bf16.mxu0 0
        %838 = vmatmul.mubr.bf16.gmra.mrb[0].mxu0 %v794
        %v839 = vpop.f32.mrb[0].mxu0
        %v840 = vadd.f32 %v736, %v839
        %v841 = vpop.f32.mrb[0].mxu0
        %v842 = vpop.f32.mrb[0].mxu0
        %v843 = vadd.f32 %v741, %v842
        %v844 = vpop.f32.mrb[0].mxu0
        %845 = vmatprep.mubr.bf16.mxu0 0
        %846 = vmatmul.mubr.bf16.gmra.mrb[0].mxu0 %v797
        %v847 = vpop.f32.mrb[0].mxu0
        %v848 = vadd.f32 %v746, %v847
        %v849 = vpop.f32.mrb[0].mxu0
        %v850 = vpop.f32.mrb[0].mxu0
        %v851 = vadd.f32 %v751, %v850
        %v852 = vpop.f32.mrb[0].mxu0
        %853 = vmatprep.mubr.bf16.mxu0 0
        %854 = vmatmul.mubr.bf16.gmra.mrb[0].mxu0 %v800
        %v855 = vpop.f32.mrb[0].mxu0
        %v856 = vadd.f32 %v756, %v855
        %v857 = vpop.f32.mrb[0].mxu0
        %v858 = vpop.f32.mrb[0].mxu0
        %v859 = vadd.f32 %v761, %v858
        %v860 = vpop.f32.mrb[0].mxu0
        %861 = vmatprep.mubr.bf16.mxu0 0
        %862 = vmatmul.mubr.bf16.gmra.mrb[0].mxu0 %v803
        %v863 = vpop.f32.mrb[0].mxu0
        %v864 = vadd.f32 %v766, %v863
        %v865 = vpop.f32.mrb[0].mxu0
        %v866 = vpop.f32.mrb[0].mxu0
        %v867 = vadd.f32 %v771, %v866
        %v868 = vpop.f32.mrb[0].mxu0
        %869 = vdwg.mxu0
        %870 = vst [vmem:[%s413] sm:$0xff] %v840
        %871 = vst [vmem:[%s413 + $0x8] sm:$0xff] %v843
        %872 = vst [vmem:[%s413 + $0x10] sm:$0xff] %v848
        %873 = vst [vmem:[%s413 + $0x18] sm:$0xff] %v851
        %874 = vst [vmem:[%s413 + $0x20] sm:$0xff] %v856
        %875 = vst [vmem:[%s413 + $0x28] sm:$0xff] %v859
        %876 = vst [vmem:[%s413 + $0x30] sm:$0xff] %v864
        %877 = vst [vmem:[%s413 + $0x38] sm:$0xff] %v867
        %s878 = sand.u32 %s233, 1
        %s879 = scalar_lea.sflag [#allocation4], %s878
        %s880 = sand.u32 %s233, 1
        %s881 = smul.addr %s880, 32
        %s882 = scalar_lea.vmem [#allocation7], %s881
        %s883 = sand.u32 %s261, 1
        %s884 = scalar_lea.sflag [#allocation9], %s883
        %s885 = sand.u32 %s261, 1
        %s886 = smul.addr %s885, 64
        %s887 = scalar_lea.vmem [#allocation8], %s886
        // Predicated region
        $region61: #{tpu_custom_call.1} parent=51 // pred_check
          %p888 = pneg %p243
        $region62: #{tpu_custom_call.1} parent=51 // pred_check_branch
          %890 = sbr.rel (%p888) target = $region64
        $region63: #{tpu_custom_call.1} parent=51 // pred_region
          %s892 = ssub.s32 512, 512
          %893 = vsyncadd %s879, %s892
          %s894 = smul.addr %s33, 4
          %s895 = sadd.s32 %s34, %s894
          %s896 = smul.addr %s895, 128
          %s897 = scalar_lea.hbm %s8, %s896
          %s898 = sshll.u32 %s882, 4
          %s899 = int_to_ptr.vmem [resolvable:$true] %s898
          %904 = dma.vmem_to_hbm [thread:$0]  %s899, 512, %s897, %s879, 128, 128, 8
        $region64: #{tpu_custom_call.1} parent=51 // pred_fallthru
          _
        // Predicated region
        $region65: #{tpu_custom_call.1} parent=51 // pred_check
          %p905 = pneg %p271
        $region66: #{tpu_custom_call.1} parent=51 // pred_check_branch
          %907 = sbr.rel (%p905) target = $region68
        $region67: #{tpu_custom_call.1} parent=51 // pred_region
          %s909 = ssub.s32 1024, 1024
          %910 = vsyncadd %s884, %s909
          %s911 = smul.addr %s33, 8
          %s912 = sadd.s32 %s34, %s911
          %s913 = smul.addr %s912, 128
          %s914 = scalar_lea.hbm %s9, %s913
          %s915 = sshll.u32 %s887, 4
          %s916 = int_to_ptr.vmem [resolvable:$true] %s915
          %921 = dma.vmem_to_hbm [thread:$0]  %s916, 1024, %s914, %s884, 128, 128, 8
        $region68: #{tpu_custom_call.1} parent=51 // pred_fallthru
          _
      $region52: #{tpu_custom_call.1} parent=5 // pred_fallthru
        _
      %p922 = scmp.le.s32.totalorder 2, %s24
      // Predicated region
      $region69: #{tpu_custom_call.1} parent=5 // pred_check
        %p923 = pneg %p922
      $region70: #{tpu_custom_call.1} parent=5 // pred_check_branch
        %925 = sbr.rel (%p923) target = $region72
      $region71: #{tpu_custom_call.1} parent=5 // pred_region
        %s926 = ssub.s32 %s24, 2
        // Predicated region
        $region73: #{tpu_custom_call.1} parent=71 // pred_check
          %p927 = pneg %p249
        $region74: #{tpu_custom_call.1} parent=71 // pred_check_branch
          %929 = sbr.rel (%p927) target = $region76
        $region75: #{tpu_custom_call.1} parent=71 // pred_region
          %s930 = sand.u32 %s234, 1
          %s931 = scalar_lea.sflag [#allocation4], %s930
          %s932 = sand.u32 %s234, 1
          %s933 = smul.addr %s932, 32
          %s934 = scalar_lea.vmem [#allocation7], %s933
          %935 = dma.done %s931, 512
        $region76: #{tpu_custom_call.1} parent=71 // pred_fallthru
          _
        // Predicated region
        $region77: #{tpu_custom_call.1} parent=71 // pred_check
          %p936 = pneg %p277
        $region78: #{tpu_custom_call.1} parent=71 // pred_check_branch
          %938 = sbr.rel (%p936) target = $region80
        $region79: #{tpu_custom_call.1} parent=71 // pred_region
          %s939 = sand.u32 %s262, 1
          %s940 = scalar_lea.sflag [#allocation9], %s939
          %s941 = sand.u32 %s262, 1
          %s942 = smul.addr %s941, 64
          %s943 = scalar_lea.vmem [#allocation8], %s942
          %944 = dma.done %s940, 1024
        $region80: #{tpu_custom_call.1} parent=71 // pred_fallthru
          _
      $region72: #{tpu_custom_call.1} parent=5 // pred_fallthru
        _
    $region6: #{tpu_custom_call.1} parent=1 // loop_footer
      %s28 = sadd.s32 1, %s24
    $region7: #{tpu_custom_call.1} parent=1 // loop_footer_branch
      %23 = sbr.rel target = $region3
    $region8: #{tpu_custom_call.1} parent=1 // loop_exit
      _
    %945 = vsyncpa [#allocation3], 1
    %s946 = scalar_lea.sflag [#allocation3], 1
    %947 = vsyncpa %s946, 1
    %948 = vsyncpa [#allocation6], 1
    %949 = vsyncpa [#allocation4], 1
    %s950 = scalar_lea.sflag [#allocation4], 1
    %951 = vsyncpa %s950, 1
    %952 = vsyncpa [#allocation9], 1
    %s953 = scalar_lea.sflag [#allocation9], 1
    %954 = vsyncpa %s953, 1

</llo_original>
